<compile_context>
chip_gen: v6e
topology: v6e:2x2x1
jax: 0.10.0
libtpu: 0.0.40
codegen_flags: <defaults>
</compile_context>

<pallas_src>
import functools

import jax
import jax.numpy as jnp
from jax.experimental import pallas as pl
from jax.experimental.pallas import tpu as pltpu

_INV_SQRT2 = 0.7071067811865475
_SQRT_2_OVER_PI = 0.7978845608028654


def _gelu(x, approximate):
    if approximate:
        # tanh formulation -> EUP slot (idle while the MXU streams).
        return 0.5 * x * (1.0 + jnp.tanh(_SQRT_2_OVER_PI * (x + 0.044715 * (x * x * x))))
    # exact erf formulation (matches nn.GELU() default numerics).
    return 0.5 * x * (1.0 + jax.lax.erf(x * _INV_SQRT2))


def _mlp_kernel(x_ref, w1_ref, b1_ref, w2_ref, b2_ref, o_ref, *scratch, gelu_approx):
    # scratch = (acc_ref,) for non-f32 outputs; for f32 outputs we accumulate
    # straight into the output block (it stays VMEM-resident across hk).
    acc_ref = scratch[0] if scratch else o_ref
    hk = pl.program_id(1)

    @pl.when(hk == 0)
    def _():
        acc_ref[...] = jnp.zeros_like(acc_ref)

    # fc1 on this hidden slice: (tm, E) @ (E, th) -> f32 accumulation on the MXU.
    h = jnp.dot(x_ref[...], w1_ref[...], preferred_element_type=jnp.float32)
    h = _gelu(h + b1_ref[...].astype(jnp.float32), gelu_approx)

    # fc2 partial product: (tm, th) @ (th, E), accumulated in f32.
    acc_ref[...] += jnp.dot(
        h.astype(w2_ref.dtype), w2_ref[...], preferred_element_type=jnp.float32
    )

    @pl.when(hk == pl.num_programs(1) - 1)
    def _():
        o_ref[...] = (acc_ref[...] + b2_ref[...].astype(jnp.float32)).astype(o_ref.dtype)


def _round_up(a, b):
    return (a + b - 1) // b * b


def _cdiv(a, b):
    return -(-a // b)


def _sublane(dtype):
    # Native sublane packing: 8 rows for 32-bit, 16 for bf16, 32 for 8-bit.
    return {4: 8, 2: 16, 1: 32}.get(jnp.dtype(dtype).itemsize, 8)


def _vmem_capacity_bytes():
    try:
        cap = getattr(pltpu.get_tpu_info(), "vmem_capacity_bytes", None)
        if cap:
            return int(cap)
    except Exception:
        pass
    return 64 << 20  # conservative (v7x-sized) fallback


def _vmem_needed(tm, th, E, cbytes, obytes, use_scratch):
    n = 2 * tm * E * cbytes            # x tile (double buffered)
    n += 2 * E * th * cbytes           # W1 hidden slab
    n += 2 * th * E * cbytes           # W2 hidden slab
    n += 2 * tm * E * obytes           # out tile
    if use_scratch:
        n += tm * E * 4                # f32 accumulator
    n += 4 * 8 * _round_up(max(th, E, 128), 128) * 4   # biases (padded, generous)
    return n


def mlp_forward(x, w1, b1, w2, b2, *, tm=None, th=512,
                cast_to_bf16=True, gelu_approximate=True):
    """y = GELU(x @ W1 + b1) @ W2 + b2 for x of shape (..., E).

    cast_to_bf16 / gelu_approximate are accuracy-gated performance options;
    set both to False to exactly reproduce the f32 / erf nn.GELU() module.
    """
    orig_shape = x.shape
    E = x.shape[-1]
    H = w1.shape[1]
    M = x.size // E
    out_dtype = x.dtype

    # bf16 MXU inputs (f32 accumulation) halve weight/activation DMA bytes and
    # give ~3-4x MXU throughput vs multi-pass f32 emulation.
    if cast_to_bf16 and jnp.dtype(out_dtype) == jnp.dtype(jnp.float32):
        compute_dtype = jnp.bfloat16
    else:
        compute_dtype = out_dtype
    cbytes = jnp.dtype(compute_dtype).itemsize
    obytes = jnp.dtype(out_dtype).itemsize

    vmem_cap = _vmem_capacity_bytes()
    vmem_budget = int(0.8 * vmem_cap)      # headroom for Mosaic internal scratch
    big_vmem = vmem_cap >= (100 << 20)     # v5e/v6e (128 MiB) vs v7x (64 MiB)

    # Row tile: weights are re-streamed once per row tile, so arithmetic
    # intensity vs weight bytes ~ 2*tm/itemsize. tm~1024 clears v6e's ~660 FLOP/B
    # weight-stream roofline; tm~512 is enough on v7x and fits its 64 MiB VMEM.
    if tm is None:
        tm = 1024 if big_vmem else 512

    need_scratch = jnp.dtype(out_dtype) != jnp.dtype(jnp.float32)

    sub = _sublane(compute_dtype)
    m_rounded = _round_up(M, sub)
    tm_eff = min(tm, m_rounded)
    # v7x shards the "parallel" row axis over its 2 TensorCores: keep >= 2 row
    # tiles when the row count allows so neither core idles.
    if (not big_vmem) and m_rounded > sub and _cdiv(m_rounded, tm_eff) < 2:
        tm_eff = _round_up(_cdiv(m_rounded, 2), sub)

    # Hidden tile: must divide H and stay lane-aligned. Keeping th >= 512 keeps
    # the lane-axis-sliced W1 DMA chunks contiguous enough (>= 1 KiB at bf16).
    th_eff = min(th, H)
    if H % th_eff != 0 or (th_eff < H and th_eff % 128 != 0):
        th_eff = H

    # Shrink the row tile until the double-buffered working set fits VMEM.
    while tm_eff > sub and _vmem_needed(tm_eff, th_eff, E, cbytes, obytes,
                                        need_scratch) > vmem_budget:
        tm_eff = max(sub, _round_up(tm_eff // 2, sub))

    M_pad = _round_up(M, tm_eff)
    grid = (M_pad // tm_eff, H // th_eff)

    x2d = x.reshape(M, E).astype(compute_dtype)
    if M_pad != M:
        x2d = jnp.pad(x2d, ((0, M_pad - M), (0, 0)))
    w1c = w1.astype(compute_dtype)
    w2c = w2.astype(compute_dtype)
    b1_2d = b1.reshape(1, H)
    b2_2d = b2.reshape(1, E)

    kernel = functools.partial(_mlp_kernel, gelu_approx=bool(gelu_approximate))
    scratch_shapes = [pltpu.VMEM((tm_eff, E), jnp.float32)] if need_scratch else []

    # TODO(synk): optionally add pipeline_mode=pl.Buffered(3) on the two weight
    # specs when the VMEM budget allows and DMA latency is still exposed.
    out2d = pl.pallas_call(
        kernel,
        out_shape=jax.ShapeDtypeStruct((M_pad, E), out_dtype),
        grid_spec=pltpu.PrefetchScalarGridSpec(
            num_scalar_prefetch=0,
            grid=grid,
            in_specs=[
                pl.BlockSpec((tm_eff, E), lambda i, hk: (i, 0)),    # x rows (resident over hk)
                pl.BlockSpec((E, th_eff), lambda i, hk: (0, hk)),   # W1 hidden slice
                pl.BlockSpec((1, th_eff), lambda i, hk: (0, hk)),   # b1 hidden slice
                pl.BlockSpec((th_eff, E), lambda i, hk: (hk, 0)),   # W2 hidden slice
                pl.BlockSpec((1, E), lambda i, hk: (0, 0)),         # b2 (full)
            ],
            out_specs=pl.BlockSpec((tm_eff, E), lambda i, hk: (i, 0)),
            scratch_shapes=scratch_shapes,
        ),
        compiler_params=pltpu.CompilerParams(
            dimension_semantics=("parallel", "arbitrary"),
            vmem_limit_bytes=vmem_budget,
        ),
    )(x2d, w1c, b1_2d, w2c, b2_2d)

    return out2d[:M].reshape(orig_shape)


def init_mlp_params(key, embed_dim, mlp_ratio=4.0, dtype=jnp.float32):
    hidden_dim = int(embed_dim * mlp_ratio)
    k1, k2, k3, k4 = jax.random.split(key, 4)
    bound1 = 1.0 / (embed_dim ** 0.5)
    bound2 = 1.0 / (hidden_dim ** 0.5)
    w1 = jax.random.uniform(k1, (embed_dim, hidden_dim), dtype, -bound1, bound1)
    b1 = jax.random.uniform(k2, (hidden_dim,), dtype, -bound1, bound1)
    w2 = jax.random.uniform(k3, (hidden_dim, embed_dim), dtype, -bound2, bound2)
    b2 = jax.random.uniform(k4, (embed_dim,), dtype, -bound2, bound2)
    return w1, b1, w2, b2


def _reference(x, w1, b1, w2, b2, *, cast_to_bf16=True, gelu_approximate=True):
    out_dtype = x.dtype
    if cast_to_bf16 and jnp.dtype(out_dtype) == jnp.dtype(jnp.float32):
        cd = jnp.bfloat16
    else:
        cd = out_dtype
    h = jnp.dot(x.astype(cd), w1.astype(cd),
                preferred_element_type=jnp.float32) + b1.astype(jnp.float32)
    h = _gelu(h, gelu_approximate)
    y = jnp.dot(h.astype(cd), w2.astype(cd),
                preferred_element_type=jnp.float32) + b2.astype(jnp.float32)
    return y.astype(out_dtype)


if __name__ == "__main__":
    key = jax.random.PRNGKey(0)
    k_x, k_x2, k_p = jax.random.split(key, 3)

    # Small but lane-dense shapes: E and H are multiples of 128.
    B, S, E = 2, 8, 128
    mlp_ratio = 4.0  # hidden_dim = 512

    x = jax.random.normal(k_x, (B, S, E), dtype=jnp.float32)
    w1, b1, w2, b2 = init_mlp_params(k_p, E, mlp_ratio)

    # 1) Performance defaults (bf16 MXU inputs, tanh GELU); th=256 exercises the
    #    hidden-reduction accumulation loop (2 hk steps).
    out = jax.block_until_ready(mlp_forward(x, w1, b1, w2, b2, th=256))
    ref = _reference(x, w1, b1, w2, b2, cast_to_bf16=True, gelu_approximate=True)
    assert out.shape == (B, S, E) and out.dtype == x.dtype
    assert jnp.allclose(out, ref, atol=2e-3, rtol=2e-3)

    # 2) Exact-semantics path (f32 MXU inputs, erf GELU = nn.GELU()) vs f32 reference.
    out_exact = jax.block_until_ready(
        mlp_forward(x, w1, b1, w2, b2, th=256, cast_to_bf16=False, gelu_approximate=False))
    ref_exact = _reference(x, w1, b1, w2, b2, cast_to_bf16=False, gelu_approximate=False)
    assert jnp.allclose(out_exact, ref_exact, atol=2e-3, rtol=2e-3)

    # 3) Ragged row count + bf16 activations (exercises pad-to-tile and the
    #    f32 VMEM accumulator scratch used for low-precision outputs).
    x_ragged = jax.random.normal(k_x2, (1, 5, E), dtype=jnp.float32).astype(jnp.bfloat16)
    out_r = jax.block_until_ready(mlp_forward(x_ragged, w1, b1, w2, b2, th=256))
    ref_r = _reference(x_ragged, w1, b1, w2, b2)
    assert out_r.shape == (1, 5, E) and out_r.dtype == jnp.bfloat16
    assert jnp.allclose(out_r.astype(jnp.float32), ref_r.astype(jnp.float32),
                        atol=2e-2, rtol=2e-2)

    print("KERNEL_OK")
</pallas_src>

<mosaic_0001>
module attributes {stable_mosaic.version = 11 : i64} {
  func.func @_mlp_kernel(%arg0: i32, %arg1: i32, %arg2: memref<16x128xbf16, #tpu.memory_space<vmem>>, %arg3: memref<128x256xbf16, #tpu.memory_space<vmem>>, %arg4: memref<1x256xf32, #tpu.memory_space<vmem>>, %arg5: memref<256x128xbf16, #tpu.memory_space<vmem>>, %arg6: memref<1x128xf32, #tpu.memory_space<vmem>>, %arg7: memref<16x128xf32, #tpu.memory_space<vmem>>) attributes {dimension_semantics = [#tpu.dimension_semantics<parallel>, #tpu.dimension_semantics<arbitrary>], iteration_bounds = array<i64: 1, 2>, scalar_prefetch = 0 : i64, scratch_operands = 0 : i64, tpu.core_type = #tpu.core_type<tc>, window_params = [{transform_indices = @transform_0, window_bounds = array<i64: 16, 128>}, {transform_indices = @transform_1, window_bounds = array<i64: 128, 256>}, {transform_indices = @transform_2, window_bounds = array<i64: 1, 256>}, {transform_indices = @transform_3, window_bounds = array<i64: 256, 128>}, {pipeline_mode = #tpu.pipeline_mode<synchronous>, transform_indices = @transform_4, window_bounds = array<i64: 1, 128>}, {transform_indices = @transform_5, window_bounds = array<i64: 16, 128>}]} {
    %c0_i32 = arith.constant 0 : i32
    %0 = arith.cmpi eq, %arg1, %c0_i32 : i32
    %1 = arith.extui %0 : i1 to i32
    %c0_i32_0 = arith.constant 0 : i32
    %2 = arith.cmpi ne, %1, %c0_i32_0 : i32
    scf.if %2 {
      %cst_18 = arith.constant 0.000000e+00 : f32
      %31 = vector.broadcast %cst_18 : f32 to vector<16x128xf32>
      %c0_19 = arith.constant 0 : index
      %c0_20 = arith.constant 0 : index
      %32 = vector.load %arg7[%c0_19, %c0_20] : memref<16x128xf32, #tpu.memory_space<vmem>>, vector<16x128xf32>
      tpu.vector_store %arg7[%c0_19, %c0_20], %31 {strides = array<i32>} : memref<16x128xf32, #tpu.memory_space<vmem>>, vector<16x128xf32>,
    } else {
    }
    %c0 = arith.constant 0 : index
    %c0_1 = arith.constant 0 : index
    %3 = vector.load %arg2[%c0, %c0_1] : memref<16x128xbf16, #tpu.memory_space<vmem>>, vector<16x128xbf16>
    %c0_2 = arith.constant 0 : index
    %c0_3 = arith.constant 0 : index
    %4 = vector.load %arg3[%c0_2, %c0_3] : memref<128x256xbf16, #tpu.memory_space<vmem>>, vector<128x256xbf16>
    %cst = arith.constant dense<0.000000e+00> : vector<16x256xf32>
    %5 = tpu.matmul %3, %4, %cst {dimension_numbers = #tpu.dot_dimension_numbers<[1], [0], [0], [1], [0, 0, 1, 1], [], []>} : vector<16x128xbf16>, vector<128x256xbf16>, vector<16x256xf32> -> vector<16x256xf32>
    %c0_4 = arith.constant 0 : index
    %c0_5 = arith.constant 0 : index
    %6 = vector.load %arg4[%c0_4, %c0_5] : memref<1x256xf32, #tpu.memory_space<vmem>>, vector<1x256xf32>
    %7 = vector.broadcast %6 : vector<1x256xf32> to vector<16x256xf32>
    %8 = arith.addf %5, %7 : vector<16x256xf32>
    %cst_6 = arith.constant 5.000000e-01 : f32
    %9 = vector.broadcast %cst_6 : f32 to vector<16x256xf32>
    %10 = arith.mulf %9, %8 : vector<16x256xf32>
    %11 = arith.mulf %8, %8 : vector<16x256xf32>
    %12 = arith.mulf %11, %8 : vector<16x256xf32>
    %cst_7 = arith.constant 4.471500e-02 : f32
    %13 = vector.broadcast %cst_7 : f32 to vector<16x256xf32>
    %14 = arith.mulf %13, %12 : vector<16x256xf32>
    %15 = arith.addf %8, %14 : vector<16x256xf32>
    %cst_8 = arith.constant 0.797884583 : f32
    %16 = vector.broadcast %cst_8 : f32 to vector<16x256xf32>
    %17 = arith.mulf %16, %15 : vector<16x256xf32>
    %18 = math.tanh %17 : vector<16x256xf32>
    %cst_9 = arith.constant 1.000000e+00 : f32
    %19 = vector.broadcast %cst_9 : f32 to vector<16x256xf32>
    %20 = arith.addf %19, %18 : vector<16x256xf32>
    %21 = arith.mulf %10, %20 : vector<16x256xf32>
    %c0_10 = arith.constant 0 : index
    %c0_11 = arith.constant 0 : index
    %22 = vector.load %arg7[%c0_10, %c0_11] : memref<16x128xf32, #tpu.memory_space<vmem>>, vector<16x128xf32>
    %23 = arith.truncf %21 : vector<16x256xf32> to vector<16x256xbf16>
    %c0_12 = arith.constant 0 : index
    %c0_13 = arith.constant 0 : index
    %24 = vector.load %arg5[%c0_12, %c0_13] : memref<256x128xbf16, #tpu.memory_space<vmem>>, vector<256x128xbf16>
    %cst_14 = arith.constant dense<0.000000e+00> : vector<16x128xf32>
    %25 = tpu.matmul %23, %24, %cst_14 {dimension_numbers = #tpu.dot_dimension_numbers<[1], [0], [0], [1], [0, 0, 1, 1], [], []>} : vector<16x256xbf16>, vector<256x128xbf16>, vector<16x128xf32> -> vector<16x128xf32>
    %26 = arith.addf %22, %25 : vector<16x128xf32>
    %c0_15 = arith.constant 0 : index
    %c0_16 = arith.constant 0 : index
    %27 = vector.load %arg7[%c0_15, %c0_16] : memref<16x128xf32, #tpu.memory_space<vmem>>, vector<16x128xf32>
    tpu.vector_store %arg7[%c0_15, %c0_16], %26 {strides = array<i32>} : memref<16x128xf32, #tpu.memory_space<vmem>>, vector<16x128xf32>,
    %c1_i32 = arith.constant 1 : i32
    %28 = arith.cmpi eq, %arg1, %c1_i32 : i32
    %29 = arith.extui %28 : i1 to i32
    %c0_i32_17 = arith.constant 0 : i32
    %30 = arith.cmpi ne, %29, %c0_i32_17 : i32
    scf.if %30 {
      %c0_18 = arith.constant 0 : index
      %c0_19 = arith.constant 0 : index
      %31 = vector.load %arg7[%c0_18, %c0_19] : memref<16x128xf32, #tpu.memory_space<vmem>>, vector<16x128xf32>
      %c0_20 = arith.constant 0 : index
      %c0_21 = arith.constant 0 : index
      %32 = vector.load %arg6[%c0_20, %c0_21] : memref<1x128xf32, #tpu.memory_space<vmem>>, vector<1x128xf32>
      %33 = vector.broadcast %32 : vector<1x128xf32> to vector<16x128xf32>
      %34 = arith.addf %31, %33 : vector<16x128xf32>
      %c0_22 = arith.constant 0 : index
      %c0_23 = arith.constant 0 : index
      %35 = vector.load %arg7[%c0_22, %c0_23] : memref<16x128xf32, #tpu.memory_space<vmem>>, vector<16x128xf32>
      tpu.vector_store %arg7[%c0_22, %c0_23], %34 {strides = array<i32>} : memref<16x128xf32, #tpu.memory_space<vmem>>, vector<16x128xf32>,
    } else {
    }
    return
  }
  func.func @transform_0(%arg0: i32, %arg1: i32) -> (i32, i32) {
    %c0_i32 = arith.constant 0 : i32
    %c0_i32_0 = arith.constant 0 : i32
    return %arg0, %c0_i32 : i32, i32
  }
  func.func @transform_1(%arg0: i32, %arg1: i32) -> (i32, i32) {
    %c0_i32 = arith.constant 0 : i32
    %c0_i32_0 = arith.constant 0 : i32
    return %c0_i32, %arg1 : i32, i32
  }
  func.func @transform_2(%arg0: i32, %arg1: i32) -> (i32, i32) {
    %c0_i32 = arith.constant 0 : i32
    %c0_i32_0 = arith.constant 0 : i32
    return %c0_i32, %arg1 : i32, i32
  }
  func.func @transform_3(%arg0: i32, %arg1: i32) -> (i32, i32) {
    %c0_i32 = arith.constant 0 : i32
    %c0_i32_0 = arith.constant 0 : i32
    return %arg1, %c0_i32 : i32, i32
  }
  func.func @transform_4(%arg0: i32, %arg1: i32) -> (i32, i32) {
    %c0_i32 = arith.constant 0 : i32
    %c0_i32_0 = arith.constant 0 : i32
    %c0_i32_1 = arith.constant 0 : i32
    return %c0_i32, %c0_i32_0 : i32, i32
  }
  func.func @transform_5(%arg0: i32, %arg1: i32) -> (i32, i32) {
    %c0_i32 = arith.constant 0 : i32
    %c0_i32_0 = arith.constant 0 : i32
    return %arg0, %c0_i32 : i32, i32
  }
}

</mosaic_0001>

<llo_original>
// kernel: tpu_custom_call.1
$region0: #{tpu_custom_call.1}
  #allocation0 [shape = 'u32[]', space=smem, size = 0x4, offset = 0x4, fixed_abs, tag = 'smem constant byte address 0x4 - core index']
  #allocation1 [shape = 'u32[144,128]{1,0:T(1,128)}', space=vmem, size = 0x12000, scoped, tag = 'internal scratch']
  %s0 = inlined_call_operand.hbm [shape: bf16[16,128], index: 0, kind: input, shape index: {}]
  %s1 = inlined_call_operand.hbm [shape: bf16[128,512], index: 1, kind: input, shape index: {}]
  %s2 = inlined_call_operand.hbm [shape: f32[1,512], index: 2, kind: input, shape index: {}]
  %s3 = inlined_call_operand.hbm [shape: bf16[512,128], index: 3, kind: input, shape index: {}]
  %s4 = inlined_call_operand.vmem [shape: f32[1,128], index: 4, kind: input, shape index: {}]
  %s5 = inlined_call_operand.hbm [shape: f32[16,128], index: 5, kind: output, shape index: {}]
  %s6 = sld [smem:[#allocation0]]
  $region77: #{tpu_custom_call.1} parent=0
    _
  %s8 = ssub.s32 1, %s6
  %s9 = scalar_select 0, %s8, %s6
  $region1: #{tpu_custom_call.1} parent=0
    #allocation2 [shape = 'u8[4096]{0}', space=vmem, size = 0x1000, scoped, tag = 'input window, operand 0, single buffered']
    #allocation3 [shape = 's32[2]{0}', space=sflag, size = 0x8, scoped, tag = 'scoped memory for tpu_custom_call.1']
    #allocation4 [shape = 's32[2]{0}', space=sflag, size = 0x8, scoped, tag = 'scoped memory for tpu_custom_call.1']
    #allocation5 [shape = 'u8[131072]{0}', space=vmem, size = 0x20000, scoped, tag = 'input window, operand 1']
    #allocation6 [shape = 's32[2]{0}', space=sflag, size = 0x8, scoped, tag = 'scoped memory for tpu_custom_call.1']
    #allocation7 [shape = 'u8[2048]{0}', space=vmem, size = 0x800, scoped, tag = 'input window, operand 2']
    #allocation8 [shape = 'u8[131072]{0}', space=vmem, size = 0x20000, scoped, tag = 'input window, operand 3']
    #allocation9 [shape = 's32[2]{0}', space=sflag, size = 0x8, scoped, tag = 'scoped memory for tpu_custom_call.1']
    #allocation10 [shape = 'u8[8192]{0}', space=vmem, size = 0x2000, scoped, tag = 'output window, operand 0, single buffered']
    %10 = vsyncpa [#allocation3], 0
    %11 = vsyncpa [#allocation6], 0
    %s12 = scalar_lea.sflag [#allocation6], 1
    %13 = vsyncpa %s12, 0
    %14 = vsyncpa [#allocation9], 0
    %s15 = scalar_lea.sflag [#allocation9], 1
    %16 = vsyncpa %s15, 0
    %17 = vsyncpa [#allocation4], 0
    loop: start=0, step=1, limit=4
    $region2: #{tpu_custom_call.1} parent=1 // loop_pre_header
      _
    $region3: #{tpu_custom_call.1} parent=1 // loop_header
      %s19 = sphi 0, %s23
      %p20 = scmp.ge.s32.totalorder %s19, 4
      %s26 = sphi 0, %s38
      %s27 = sphi 0, %s34
      %s28 = sphi 0, %s26
      %s29 = sphi 0, %s27
      %s30 = sphi 0, %s28
      %s31 = sphi 0, %s29
      %s41 = sphi 0, %s43
      %s44 = sphi 0, %s41
      %s45 = sphi 0, %s44
      %s61 = sphi 0, %s45
      %s67 = sphi 0, %s69
      %s70 = sphi 0, %s67
      %s71 = sphi 0, %s70
      %s87 = sphi 0, %s71
      %s93 = sphi 0, %s95
      %s96 = sphi 0, %s93
      %s97 = sphi 0, %s96
      %s113 = sphi 0, %s97
      %s119 = sphi 0, %s121
      %s122 = sphi 0, %s119
      %s123 = sphi 0, %s122
      %s139 = sphi 0, %s123
      %s143 = sphi 0, %s143
      %s145 = sphi 0, %s143
      %s146 = sphi 0, %s145
      %s160 = sphi 0, %s146
      %s166 = sphi 0, %s168
      %s169 = sphi 0, %s166
      %s170 = sphi 0, %s169
      %s186 = sphi 0, %s170
    $region4: #{tpu_custom_call.1} parent=1 // loop_header_branch
      %22 = sbr.rel (%p20) target = $region8
    $region5: #{tpu_custom_call.1} parent=1 // loop_body
      %s24 = ssub.s32 %s19, 1
      %s25 = ssub.s32 %s19, 2
      %s32 = sadd.s32 1, %s27
      %p33 = scmp.ge.s32.totalorder %s32, 2
      %s34 = scalar_select %p33, 0, %s32
      %s35 = sadd.s32 1, %s26
      %s36 = scalar_select %p33, %s35, %s26
      %p37 = scmp.ge.s32.totalorder %s36, 1
      %s38 = scalar_select %p37, 0, %s36
      %s39 = ssub.s32 %s26, %s38
      %p40 = scmp.eq.s32.totalorder %s39, 0
      %s42 = sadd.s32 %s41, 1
      %s43 = scalar_select %p40, %s41, %s42
      %p46 = pneg %p40
      %p47 = scmp.eq.s32.totalorder %s19, 1
      %p48 = por %p46, %p47
      %p49 = scmp.ne.s32.totalorder %s41, %s44
      %p50 = scmp.eq.s32.totalorder %s19, 0
      %p51 = por %p49, %p50
      %p52 = scmp.ne.s32.totalorder %s41, %s44
      %p53 = scmp.eq.s32.totalorder %s24, 1
      %p54 = por %p52, %p53
      %p55 = scmp.ne.s32.totalorder %s44, %s45
      %p56 = scmp.eq.s32.totalorder %s24, 0
      %p57 = por %p55, %p56
      %p58 = scmp.ne.s32.totalorder %s44, %s45
      %p59 = scmp.eq.s32.totalorder %s25, 1
      %p60 = por %p58, %p59
      %p62 = scmp.ne.s32.totalorder %s45, %s61
      %p63 = scmp.eq.s32.totalorder %s25, 0
      %p64 = por %p62, %p63
      %s65 = ssub.s32 %s27, %s34
      %p66 = scmp.eq.s32.totalorder %s65, 0
      %s68 = sadd.s32 %s67, 1
      %s69 = scalar_select %p66, %s67, %s68
      %p72 = pneg %p66
      %p73 = scmp.eq.s32.totalorder %s19, 1
      %p74 = por %p72, %p73
      %p75 = scmp.ne.s32.totalorder %s67, %s70
      %p76 = scmp.eq.s32.totalorder %s19, 0
      %p77 = por %p75, %p76
      %p78 = scmp.ne.s32.totalorder %s67, %s70
      %p79 = scmp.eq.s32.totalorder %s24, 1
      %p80 = por %p78, %p79
      %p81 = scmp.ne.s32.totalorder %s70, %s71
      %p82 = scmp.eq.s32.totalorder %s24, 0
      %p83 = por %p81, %p82
      %p84 = scmp.ne.s32.totalorder %s70, %s71
      %p85 = scmp.eq.s32.totalorder %s25, 1
      %p86 = por %p84, %p85
      %p88 = scmp.ne.s32.totalorder %s71, %s87
      %p89 = scmp.eq.s32.totalorder %s25, 0
      %p90 = por %p88, %p89
      %s91 = ssub.s32 %s27, %s34
      %p92 = scmp.eq.s32.totalorder %s91, 0
      %s94 = sadd.s32 %s93, 1
      %s95 = scalar_select %p92, %s93, %s94
      %p98 = pneg %p92
      %p99 = scmp.eq.s32.totalorder %s19, 1
      %p100 = por %p98, %p99
      %p101 = scmp.ne.s32.totalorder %s93, %s96
      %p102 = scmp.eq.s32.totalorder %s19, 0
      %p103 = por %p101, %p102
      %p104 = scmp.ne.s32.totalorder %s93, %s96
      %p105 = scmp.eq.s32.totalorder %s24, 1
      %p106 = por %p104, %p105
      %p107 = scmp.ne.s32.totalorder %s96, %s97
      %p108 = scmp.eq.s32.totalorder %s24, 0
      %p109 = por %p107, %p108
      %p110 = scmp.ne.s32.totalorder %s96, %s97
      %p111 = scmp.eq.s32.totalorder %s25, 1
      %p112 = por %p110, %p111
      %p114 = scmp.ne.s32.totalorder %s97, %s113
      %p115 = scmp.eq.s32.totalorder %s25, 0
      %p116 = por %p114, %p115
      %s117 = ssub.s32 %s27, %s34
      %p118 = scmp.eq.s32.totalorder %s117, 0
      %s120 = sadd.s32 %s119, 1
      %s121 = scalar_select %p118, %s119, %s120
      %p124 = pneg %p118
      %p125 = scmp.eq.s32.totalorder %s19, 1
      %p126 = por %p124, %p125
      %p127 = scmp.ne.s32.totalorder %s119, %s122
      %p128 = scmp.eq.s32.totalorder %s19, 0
      %p129 = por %p127, %p128
      %p130 = scmp.ne.s32.totalorder %s119, %s122
      %p131 = scmp.eq.s32.totalorder %s24, 1
      %p132 = por %p130, %p131
      %p133 = scmp.ne.s32.totalorder %s122, %s123
      %p134 = scmp.eq.s32.totalorder %s24, 0
      %p135 = por %p133, %p134
      %p136 = scmp.ne.s32.totalorder %s122, %s123
      %p137 = scmp.eq.s32.totalorder %s25, 1
      %p138 = por %p136, %p137
      %p140 = scmp.ne.s32.totalorder %s123, %s139
      %p141 = scmp.eq.s32.totalorder %s25, 0
      %p142 = por %p140, %p141
      %s144 = sadd.s32 %s143, 1
      %p147 = scmp.eq.s32.totalorder %s19, 1
      %p148 = scmp.ne.s32.totalorder %s143, %s145
      %p149 = scmp.eq.s32.totalorder %s19, 0
      %p150 = por %p148, %p149
      %p151 = scmp.ne.s32.totalorder %s143, %s145
      %p152 = scmp.eq.s32.totalorder %s24, 1
      %p153 = por %p151, %p152
      %p154 = scmp.ne.s32.totalorder %s145, %s146
      %p155 = scmp.eq.s32.totalorder %s24, 0
      %p156 = por %p154, %p155
      %p157 = scmp.ne.s32.totalorder %s145, %s146
      %p158 = scmp.eq.s32.totalorder %s25, 1
      %p159 = por %p157, %p158
      %p161 = scmp.ne.s32.totalorder %s146, %s160
      %p162 = scmp.eq.s32.totalorder %s25, 0
      %p163 = por %p161, %p162
      %s164 = ssub.s32 %s26, %s38
      %p165 = scmp.eq.s32.totalorder %s164, 0
      %s167 = sadd.s32 %s166, 1
      %s168 = scalar_select %p165, %s166, %s167
      %p171 = pneg %p165
      %p172 = scmp.eq.s32.totalorder %s19, 1
      %p173 = por %p171, %p172
      %p174 = scmp.ne.s32.totalorder %s166, %s169
      %p175 = scmp.eq.s32.totalorder %s19, 0
      %p176 = por %p174, %p175
      %p177 = scmp.ne.s32.totalorder %s166, %s169
      %p178 = scmp.eq.s32.totalorder %s24, 1
      %p179 = por %p177, %p178
      %p180 = scmp.ne.s32.totalorder %s169, %s170
      %p181 = scmp.eq.s32.totalorder %s24, 0
      %p182 = por %p180, %p181
      %p183 = scmp.ne.s32.totalorder %s169, %s170
      %p184 = scmp.eq.s32.totalorder %s25, 1
      %p185 = por %p183, %p184
      %p187 = scmp.ne.s32.totalorder %s170, %s186
      %p188 = scmp.eq.s32.totalorder %s25, 0
      %p189 = por %p187, %p188
      %p190 = scmp.le.s32.totalorder 1, %s19
      %p191 = scmp.lt.s32.totalorder %s19, 3
      %p192 = pnand %p190, %p191
      %p193 = pneg %p192
      // Predicated region
      $region9: #{tpu_custom_call.1} parent=5 // pred_check
        _
      $region10: #{tpu_custom_call.1} parent=5 // pred_check_branch
        %195 = sbr.rel (%p192) target = $region12
      $region11: #{tpu_custom_call.1} parent=5 // pred_region
        %s196 = ssub.s32 %s19, 1
        // Predicated region
        $region13: #{tpu_custom_call.1} parent=11 // pred_check
          %p197 = pneg %p57
        $region14: #{tpu_custom_call.1} parent=11 // pred_check_branch
          %199 = sbr.rel (%p197) target = $region16
        $region15: #{tpu_custom_call.1} parent=11 // pred_region
          %s200 = smul.u32 2, %s28
          %s202 = ssub.s32 128, 128
          %203 = vsyncadd [#allocation3], %s202
          %s204 = smul.addr %s200, 64
          %s205 = scalar_lea.hbm %s0, %s204
          %s206 = sshll.u32 [#allocation2], 4
          %s207 = int_to_ptr.vmem [resolvable:$true] %s206
          %212 = dma.hbm_to_vmem [thread:$0]  %s205, 128, %s207, [#allocation3], 64, 64, 4
        $region16: #{tpu_custom_call.1} parent=11 // pred_fallthru
          _
        // Predicated region
        $region17: #{tpu_custom_call.1} parent=11 // pred_check
          %p213 = pneg %p156
        $region18: #{tpu_custom_call.1} parent=11 // pred_check_branch
          %215 = sbr.rel (%p213) target = $region20
        $region19: #{tpu_custom_call.1} parent=11 // pred_region
          _
        $region20: #{tpu_custom_call.1} parent=11 // pred_fallthru
          _
      $region12: #{tpu_custom_call.1} parent=5 // pred_fallthru
        _
      %p216 = scmp.lt.s32.totalorder %s19, 2
      // Predicated region
      $region21: #{tpu_custom_call.1} parent=5 // pred_check
        %p217 = pneg %p216
      $region22: #{tpu_custom_call.1} parent=5 // pred_check_branch
        %219 = sbr.rel (%p217) target = $region24
      $region23: #{tpu_custom_call.1} parent=5 // pred_region
        // Predicated region
        $region25: #{tpu_custom_call.1} parent=23 // pred_check
          %p220 = pneg %p77
        $region26: #{tpu_custom_call.1} parent=23 // pred_check_branch
          %222 = sbr.rel (%p220) target = $region28
        $region27: #{tpu_custom_call.1} parent=23 // pred_region
          %s223 = sand.u32 %s19, 1
          %s224 = scalar_lea.sflag [#allocation6], %s223
          %s225 = sand.u32 %s67, 1
          %s226 = smul.addr %s225, 128
          %s227 = scalar_lea.vmem [#allocation5], %s226
          %s228 = smul.u32 2, %s27
          %s230 = ssub.s32 2048, 2048
          %231 = vsyncadd %s224, %s230
          %s232 = smul.addr %s228, 64
          %s233 = scalar_lea.hbm %s1, %s232
          %s234 = sshll.u32 %s227, 4
          %s235 = int_to_ptr.vmem [resolvable:$true] %s234
          %240 = dma.hbm_to_vmem [thread:$0]  %s233, 2048, %s235, %s224, 256, 128, 8
        $region28: #{tpu_custom_call.1} parent=23 // pred_fallthru
          _
        // Predicated region
        $region29: #{tpu_custom_call.1} parent=23 // pred_check
          %p241 = pneg %p103
        $region30: #{tpu_custom_call.1} parent=23 // pred_check_branch
          %243 = sbr.rel (%p241) target = $region32
        $region31: #{tpu_custom_call.1} parent=23 // pred_region
          %s244 = sand.u32 %s19, 1
          %s245 = scalar_lea.sflag [#allocation6], %s244
          %s246 = sand.u32 %s93, 1
          %s247 = smul.addr %s246, 2
          %s248 = scalar_lea.vmem [#allocation7], %s247
          %s249 = smul.u32 2, %s27
          %s251 = ssub.s32 32, 32
          %252 = vsyncadd %s245, %s251
          %s253 = smul.addr %s249, 16
          %s254 = scalar_lea.hbm %s2, %s253
          %s256 = sshll.u32 %s248, 4
          %s257 = int_to_ptr.vmem [resolvable:$true] %s256
          %259 = dma.hbm_to_vmem [thread:$0]  %s254, 32, %s257, %s245
        $region32: #{tpu_custom_call.1} parent=23 // pred_fallthru
          _
        // Predicated region
        $region33: #{tpu_custom_call.1} parent=23 // pred_check
          %p260 = pneg %p129
        $region34: #{tpu_custom_call.1} parent=23 // pred_check_branch
          %262 = sbr.rel (%p260) target = $region36
        $region35: #{tpu_custom_call.1} parent=23 // pred_region
          %s263 = sand.u32 %s119, 1
          %s264 = scalar_lea.sflag [#allocation9], %s263
          %s265 = sand.u32 %s119, 1
          %s266 = smul.addr %s265, 128
          %s267 = scalar_lea.vmem [#allocation8], %s266
          %s268 = smul.u32 32, %s27
          %s270 = ssub.s32 2048, 2048
          %271 = vsyncadd %s264, %s270
          %s272 = smul.addr %s268, 64
          %s273 = scalar_lea.hbm %s3, %s272
          %s274 = sshll.u32 %s267, 4
          %s275 = int_to_ptr.vmem [resolvable:$true] %s274
          %280 = dma.hbm_to_vmem [thread:$0]  %s273, 2048, %s275, %s264, 64, 64, 4
        $region36: #{tpu_custom_call.1} parent=23 // pred_fallthru
          _
      $region24: #{tpu_custom_call.1} parent=5 // pred_fallthru
        _
      %p281 = scmp.le.s32.totalorder 1, %s19
      %p282 = scmp.lt.s32.totalorder %s19, 3
      %p283 = pnand %p281, %p282
      %p284 = pneg %p283
      // Predicated region
      $region37: #{tpu_custom_call.1} parent=5 // pred_check
        _
      $region38: #{tpu_custom_call.1} parent=5 // pred_check_branch
        %286 = sbr.rel (%p283) target = $region40
      $region39: #{tpu_custom_call.1} parent=5 // pred_region
        %s287 = ssub.s32 %s19, 1
        // Predicated region
        $region41: #{tpu_custom_call.1} parent=39 // pred_check
          %p288 = pneg %p57
        $region42: #{tpu_custom_call.1} parent=39 // pred_check_branch
          %290 = sbr.rel (%p288) target = $region44
        $region43: #{tpu_custom_call.1} parent=39 // pred_region
          %291 = dma.done [#allocation3], 128
        $region44: #{tpu_custom_call.1} parent=39 // pred_fallthru
          _
        %s292 = sand.u32 %s24, 1
        %s293 = scalar_lea.sflag [#allocation6], %s292
        %s294 = sand.u32 %s70, 1
        %s295 = smul.addr %s294, 128
        %s296 = scalar_lea.vmem [#allocation5], %s295
        // Predicated region
        $region45: #{tpu_custom_call.1} parent=39 // pred_check
          %p297 = pneg %p83
        $region46: #{tpu_custom_call.1} parent=39 // pred_check_branch
          %299 = sbr.rel (%p297) target = $region48
        $region47: #{tpu_custom_call.1} parent=39 // pred_region
          %300 = dma.done %s293, 2048
        $region48: #{tpu_custom_call.1} parent=39 // pred_fallthru
          _
        %s301 = sand.u32 %s24, 1
        %s302 = scalar_lea.sflag [#allocation6], %s301
        %s303 = sand.u32 %s96, 1
        %s304 = smul.addr %s303, 2
        %s305 = scalar_lea.vmem [#allocation7], %s304
        // Predicated region
        $region49: #{tpu_custom_call.1} parent=39 // pred_check
          %p306 = pneg %p109
        $region50: #{tpu_custom_call.1} parent=39 // pred_check_branch
          %308 = sbr.rel (%p306) target = $region52
        $region51: #{tpu_custom_call.1} parent=39 // pred_region
          %309 = dma.done %s302, 32
        $region52: #{tpu_custom_call.1} parent=39 // pred_fallthru
          _
        %s310 = sand.u32 %s122, 1
        %s311 = scalar_lea.sflag [#allocation9], %s310
        %s312 = sand.u32 %s122, 1
        %s313 = smul.addr %s312, 128
        %s314 = scalar_lea.vmem [#allocation8], %s313
        // Predicated region
        $region53: #{tpu_custom_call.1} parent=39 // pred_check
          %p315 = pneg %p135
        $region54: #{tpu_custom_call.1} parent=39 // pred_check_branch
          %317 = sbr.rel (%p315) target = $region56
        $region55: #{tpu_custom_call.1} parent=39 // pred_region
          %318 = dma.done %s311, 2048
        $region56: #{tpu_custom_call.1} parent=39 // pred_fallthru
          _
        %p319 = pneg %p57
        %p320 = pneg %p54
        %s321 = sand.u32 %s24, 1
        %s322 = scalar_lea.sflag [#allocation6], %s321
        %s323 = sand.u32 %s70, 1
        %s324 = smul.addr %s323, 128
        %s325 = scalar_lea.vmem [#allocation5], %s324
        %p326 = pneg %p83
        %p327 = pneg %p80
        %s328 = sand.u32 %s24, 1
        %s329 = scalar_lea.sflag [#allocation6], %s328
        %s330 = sand.u32 %s96, 1
        %s331 = smul.addr %s330, 2
        %s332 = scalar_lea.vmem [#allocation7], %s331
        %p333 = pneg %p109
        %p334 = pneg %p106
        %s335 = sand.u32 %s122, 1
        %s336 = scalar_lea.sflag [#allocation9], %s335
        %s337 = sand.u32 %s122, 1
        %s338 = smul.addr %s337, 128
        %s339 = scalar_lea.vmem [#allocation8], %s338
        %p340 = pneg %p135
        %p341 = pneg %p132
        %p342 = pneg %p156
        %p343 = pneg %p153
        %p344 = pneg %p182
        %p345 = pneg %p179
        %s346 = smul.u32 2, %s28
        %s347 = smul.u32 2, %s29
        %s348 = smul.u32 2, %s29
        %s349 = smul.u32 32, %s29
        %s350 = smul.u32 2, %s28
        %p352 = scmp.eq.s32.totalorder %s29, 0
        // Predicated region
        $region57: #{tpu_custom_call.1} parent=39 // pred_check
          %p353 = pneg %p352
        $region58: #{tpu_custom_call.1} parent=39 // pred_check_branch
          %355 = sbr.rel (%p353) target = $region60
        $region59: #{tpu_custom_call.1} parent=39 // pred_region
          %356 = vst [vmem:[#allocation10] sm:$0xff] 0.0
          %357 = vst [vmem:[#allocation10 + $0x8] sm:$0xff] 0.0
        $region60: #{tpu_custom_call.1} parent=39 // pred_fallthru
          _
        %v358 = vld [vmem:[#allocation2] sm:$0xf]
        %v359 = vld [vmem:[#allocation2 + $0x4] sm:$0xf]
        %v360 = vld [vmem:[%s296] sm:$0xff]
        %v361 = vld [vmem:[%s296 + $0x8] sm:$0xff]
        %v362 = vld [vmem:[%s296 + $0x10] sm:$0xff]
        %v363 = vld [vmem:[%s296 + $0x18] sm:$0xff]
        %v364 = vld [vmem:[%s296 + $0x20] sm:$0xff]
        %v365 = vld [vmem:[%s296 + $0x28] sm:$0xff]
        %v366 = vld [vmem:[%s296 + $0x30] sm:$0xff]
        %v367 = vld [vmem:[%s296 + $0x38] sm:$0xff]
        %v368 = vld [vmem:[%s296 + $0x40] sm:$0xff]
        %v369 = vld [vmem:[%s296 + $0x48] sm:$0xff]
        %v370 = vld [vmem:[%s296 + $0x50] sm:$0xff]
        %v371 = vld [vmem:[%s296 + $0x58] sm:$0xff]
        %v372 = vld [vmem:[%s296 + $0x60] sm:$0xff]
        %v373 = vld [vmem:[%s296 + $0x68] sm:$0xff]
        %v374 = vld [vmem:[%s296 + $0x70] sm:$0xff]
        %v375 = vld [vmem:[%s296 + $0x78] sm:$0xff]
        %v376 = vld [vmem:[%s305] sm:$0x3]
        %v378 = vlaneseq
        %v379 = vshrl.u32 %v378, 7
        %v380 = vsub.s32 0, %v379
        %v381 = vrot.slane %v376, %v380
        %v382 = vlaneseq
        %v383 = vshrl.u32 %v382, 7
        %v384 = vsub.s32 1, %v383
        %v385 = vrot.slane %v376, %v384
        %v390 = vunpack.c.l.b16 %v358
        %v391 = vunpack.c.l.b16 %v359
        %v392 = vpack.c.b16 %v391, %v390
        %v410 = vunpack.c.l.b16 %v360
        %v411 = vunpack.c.h.b16 %v360
        %v412 = vunpack.c.l.b16 %v361
        %v413 = vunpack.c.h.b16 %v361
        %v414 = vunpack.c.l.b16 %v362
        %v415 = vunpack.c.h.b16 %v362
        %v416 = vunpack.c.l.b16 %v363
        %v417 = vunpack.c.h.b16 %v363
        %v418 = vunpack.c.l.b16 %v364
        %v419 = vunpack.c.h.b16 %v364
        %v420 = vunpack.c.l.b16 %v365
        %v421 = vunpack.c.h.b16 %v365
        %v422 = vunpack.c.l.b16 %v366
        %v423 = vunpack.c.h.b16 %v366
        %v424 = vunpack.c.l.b16 %v367
        %v425 = vunpack.c.h.b16 %v367
        %v426 = vunpack.c.l.b16 %v368
        %v427 = vunpack.c.h.b16 %v368
        %v428 = vunpack.c.l.b16 %v369
        %v429 = vunpack.c.h.b16 %v369
        %v430 = vunpack.c.l.b16 %v370
        %v431 = vunpack.c.h.b16 %v370
        %v432 = vunpack.c.l.b16 %v371
        %v433 = vunpack.c.h.b16 %v371
        %v434 = vunpack.c.l.b16 %v372
        %v435 = vunpack.c.h.b16 %v372
        %v436 = vunpack.c.l.b16 %v373
        %v437 = vunpack.c.h.b16 %v373
        %v438 = vunpack.c.l.b16 %v374
        %v439 = vunpack.c.h.b16 %v374
        %v440 = vunpack.c.l.b16 %v375
        %v441 = vunpack.c.h.b16 %v375
        %v442 = vpack.c.b16 %v412, %v410
        %v443 = vpack.c.b16 %v413, %v411
        %v444 = vpack.c.b16 %v416, %v414
        %v445 = vpack.c.b16 %v417, %v415
        %v446 = vpack.c.b16 %v420, %v418
        %v447 = vpack.c.b16 %v421, %v419
        %v448 = vpack.c.b16 %v424, %v422
        %v449 = vpack.c.b16 %v425, %v423
        %v450 = vpack.c.b16 %v428, %v426
        %v451 = vpack.c.b16 %v429, %v427
        %v452 = vpack.c.b16 %v432, %v430
        %v453 = vpack.c.b16 %v433, %v431
        %v454 = vpack.c.b16 %v436, %v434
        %v455 = vpack.c.b16 %v437, %v435
        %v456 = vpack.c.b16 %v440, %v438
        %v457 = vpack.c.b16 %v441, %v439
        %474 = vmatprep.subr.bf16.mxu0 %v457
        %475 = vmatpush1.bf16.msra.mxu0 %v456
        %476 = vmatprep.subr.bf16.mxu0 %v455
        %477 = vmatpush1.bf16.msra.mxu0 %v454
        %478 = vmatprep.subr.bf16.mxu0 %v453
        %479 = vmatpush1.bf16.msra.mxu0 %v452
        %480 = vmatprep.subr.bf16.mxu0 %v451
        %481 = vmatpush1.bf16.msra.mxu0 %v450
        %482 = vmatprep.subr.bf16.mxu0 %v449
        %483 = vmatpush1.bf16.msra.mxu0 %v448
        %484 = vmatprep.subr.bf16.mxu0 %v447
        %485 = vmatpush1.bf16.msra.mxu0 %v446
        %486 = vmatprep.subr.bf16.mxu0 %v445
        %487 = vmatpush1.bf16.msra.mxu0 %v444
        %488 = vmatprep.subr.bf16.mxu0 %v443
        %489 = vmatpush1.bf16.msra.mxu0 %v442
        %490 = vmatprep.subr.bf16.mxu0 0
        %491 = vmatpush2.bf16.msra.mxu0 0
        %492 = vmatprep.subr.bf16.mxu0 0
        %493 = vmatpush2.bf16.msra.mxu0 0
        %494 = vmatprep.subr.bf16.mxu0 0
        %495 = vmatpush2.bf16.msra.mxu0 0
        %496 = vmatprep.subr.bf16.mxu0 0
        %497 = vmatpush2.bf16.msra.mxu0 0
        %498 = vmatprep.subr.bf16.mxu0 0
        %499 = vmatpush2.bf16.msra.mxu0 0
        %500 = vmatprep.subr.bf16.mxu0 0
        %501 = vmatpush2.bf16.msra.mxu0 0
        %502 = vmatprep.subr.bf16.mxu0 0
        %503 = vmatpush2.bf16.msra.mxu0 0
        %504 = vmatprep.subr.bf16.mxu0 0
        %505 = vmatpush2.bf16.msra.mxu0 0
        %506 = vmatprep.mubr.bf16.mxu0 0
        %507 = vmatmul.mubr.bf16.gmra.mxu0 %v392
        %v508 = vpop.f32.mrf.mxu0
        %v509 = vadd.f32 %v381, %v508
        %v510 = vpop.f32.mrf.mxu0
        %v511 = vadd.f32 %v385, %v510
        %v512 = vpop.f32.mrf.mxu0
        %v513 = vadd.f32 %v381, %v512
        %v514 = vpop.f32.mrf.mxu0
        %v515 = vadd.f32 %v385, %v514
        %516 = vdwg.mxu0
        %v517 = vmul.f32 %v509, 0.5
        %v518 = vmul.f32 %v511, 0.5
        %v519 = vmul.f32 %v513, 0.5
        %v520 = vmul.f32 %v515, 0.5
        %v521 = vmul.f32 %v509, %v509
        %v522 = vmul.f32 %v511, %v511
        %v523 = vmul.f32 %v513, %v513
        %v524 = vmul.f32 %v515, %v515
        %v525 = vmul.f32 %v521, %v509
        %v526 = vmul.f32 %v522, %v511
        %v527 = vmul.f32 %v523, %v513
        %v528 = vmul.f32 %v524, %v515
        %v529 = vmul.f32 %v525, 0.044715
        %v530 = vmul.f32 %v526, 0.044715
        %v531 = vmul.f32 %v527, 0.044715
        %v532 = vmul.f32 %v528, 0.044715
        %v533 = vadd.f32 %v509, %v529
        %v534 = vadd.f32 %v511, %v530
        %v535 = vadd.f32 %v513, %v531
        %v536 = vadd.f32 %v515, %v532
        %v537 = vmul.f32 %v533, 0.7978846
        %v538 = vmul.f32 %v534, 0.7978846
        %v539 = vmul.f32 %v535, 0.7978846
        %v540 = vmul.f32 %v536, 0.7978846
        %v541 = vtanh.pop %v537
        %v542 = vtanh.pop %v538
        %v543 = vtanh.pop %v539
        %v544 = vtanh.pop %v540
        %v545 = vadd.f32 %v541, 1.0
        %v546 = vadd.f32 %v542, 1.0
        %v547 = vadd.f32 %v543, 1.0
        %v548 = vadd.f32 %v544, 1.0
        %v549 = vmul.f32 %v517, %v545
        %v550 = vmul.f32 %v518, %v546
        %v551 = vmul.f32 %v519, %v547
        %v552 = vmul.f32 %v520, %v548
        %v553 = vld [vmem:[#allocation10] sm:$0xff]
        %v554 = vld [vmem:[#allocation10 + $0x8] sm:$0xff]
        %v555 = vpack.c.bf16 %v551, %v549
        %v556 = vpack.c.bf16 %v552, %v550
        %v557 = vld [vmem:[%s314] sm:$0xf]
        %v558 = vld [vmem:[%s314 + $0x4] sm:$0xf]
        %v559 = vld [vmem:[%s314 + $0x8] sm:$0xf]
        %v560 = vld [vmem:[%s314 + $0xc] sm:$0xf]
        %v561 = vld [vmem:[%s314 + $0x10] sm:$0xf]
        %v562 = vld [vmem:[%s314 + $0x14] sm:$0xf]
        %v563 = vld [vmem:[%s314 + $0x18] sm:$0xf]
        %v564 = vld [vmem:[%s314 + $0x1c] sm:$0xf]
        %v565 = vld [vmem:[%s314 + $0x20] sm:$0xf]
        %v566 = vld [vmem:[%s314 + $0x24] sm:$0xf]
        %v567 = vld [vmem:[%s314 + $0x28] sm:$0xf]
        %v568 = vld [vmem:[%s314 + $0x2c] sm:$0xf]
        %v569 = vld [vmem:[%s314 + $0x30] sm:$0xf]
        %v570 = vld [vmem:[%s314 + $0x34] sm:$0xf]
        %v571 = vld [vmem:[%s314 + $0x38] sm:$0xf]
        %v572 = vld [vmem:[%s314 + $0x3c] sm:$0xf]
        %v573 = vld [vmem:[%s314 + $0x40] sm:$0xf]
        %v574 = vld [vmem:[%s314 + $0x44] sm:$0xf]
        %v575 = vld [vmem:[%s314 + $0x48] sm:$0xf]
        %v576 = vld [vmem:[%s314 + $0x4c] sm:$0xf]
        %v577 = vld [vmem:[%s314 + $0x50] sm:$0xf]
        %v578 = vld [vmem:[%s314 + $0x54] sm:$0xf]
        %v579 = vld [vmem:[%s314 + $0x58] sm:$0xf]
        %v580 = vld [vmem:[%s314 + $0x5c] sm:$0xf]
        %v581 = vld [vmem:[%s314 + $0x60] sm:$0xf]
        %v582 = vld [vmem:[%s314 + $0x64] sm:$0xf]
        %v583 = vld [vmem:[%s314 + $0x68] sm:$0xf]
        %v584 = vld [vmem:[%s314 + $0x6c] sm:$0xf]
        %v585 = vld [vmem:[%s314 + $0x70] sm:$0xf]
        %v586 = vld [vmem:[%s314 + $0x74] sm:$0xf]
        %v587 = vld [vmem:[%s314 + $0x78] sm:$0xf]
        %v588 = vld [vmem:[%s314 + $0x7c] sm:$0xf]
        %v621 = vunpack.c.l.b16 %v557
        %v622 = vunpack.c.l.b16 %v558
        %v623 = vunpack.c.l.b16 %v559
        %v624 = vunpack.c.l.b16 %v560
        %v625 = vunpack.c.l.b16 %v561
        %v626 = vunpack.c.l.b16 %v562
        %v627 = vunpack.c.l.b16 %v563
        %v628 = vunpack.c.l.b16 %v564
        %v629 = vunpack.c.l.b16 %v565
        %v630 = vunpack.c.l.b16 %v566
        %v631 = vunpack.c.l.b16 %v567
        %v632 = vunpack.c.l.b16 %v568
        %v633 = vunpack.c.l.b16 %v569
        %v634 = vunpack.c.l.b16 %v570
        %v635 = vunpack.c.l.b16 %v571
        %v636 = vunpack.c.l.b16 %v572
        %v637 = vunpack.c.l.b16 %v573
        %v638 = vunpack.c.l.b16 %v574
        %v639 = vunpack.c.l.b16 %v575
        %v640 = vunpack.c.l.b16 %v576
        %v641 = vunpack.c.l.b16 %v577
        %v642 = vunpack.c.l.b16 %v578
        %v643 = vunpack.c.l.b16 %v579
        %v644 = vunpack.c.l.b16 %v580
        %v645 = vunpack.c.l.b16 %v581
        %v646 = vunpack.c.l.b16 %v582
        %v647 = vunpack.c.l.b16 %v583
        %v648 = vunpack.c.l.b16 %v584
        %v649 = vunpack.c.l.b16 %v585
        %v650 = vunpack.c.l.b16 %v586
        %v651 = vunpack.c.l.b16 %v587
        %v652 = vunpack.c.l.b16 %v588
        %v653 = vpack.c.b16 %v622, %v621
        %v654 = vpack.c.b16 %v624, %v623
        %v655 = vpack.c.b16 %v626, %v625
        %v656 = vpack.c.b16 %v628, %v627
        %v657 = vpack.c.b16 %v630, %v629
        %v658 = vpack.c.b16 %v632, %v631
        %v659 = vpack.c.b16 %v634, %v633
        %v660 = vpack.c.b16 %v636, %v635
        %v661 = vpack.c.b16 %v638, %v637
        %v662 = vpack.c.b16 %v640, %v639
        %v663 = vpack.c.b16 %v642, %v641
        %v664 = vpack.c.b16 %v644, %v643
        %v665 = vpack.c.b16 %v646, %v645
        %v666 = vpack.c.b16 %v648, %v647
        %v667 = vpack.c.b16 %v650, %v649
        %v668 = vpack.c.b16 %v652, %v651
        %685 = vmatprep.subr.bf16.mxu0 0
        %686 = vmatpush1.bf16.msra.mxu0 %v660
        %687 = vmatprep.subr.bf16.mxu0 0
        %688 = vmatpush1.bf16.msra.mxu0 %v659
        %689 = vmatprep.subr.bf16.mxu0 0
        %690 = vmatpush1.bf16.msra.mxu0 %v658
        %691 = vmatprep.subr.bf16.mxu0 0
        %692 = vmatpush1.bf16.msra.mxu0 %v657
        %693 = vmatprep.subr.bf16.mxu0 0
        %694 = vmatpush1.bf16.msra.mxu0 %v656
        %695 = vmatprep.subr.bf16.mxu0 0
        %696 = vmatpush1.bf16.msra.mxu0 %v655
        %697 = vmatprep.subr.bf16.mxu0 0
        %698 = vmatpush1.bf16.msra.mxu0 %v654
        %699 = vmatprep.subr.bf16.mxu0 0
        %700 = vmatpush1.bf16.msra.mxu0 %v653
        %701 = vmatprep.subr.bf16.mxu0 0
        %702 = vmatpush2.bf16.msra.mxu0 %v668
        %703 = vmatprep.subr.bf16.mxu0 0
        %704 = vmatpush2.bf16.msra.mxu0 %v667
        %705 = vmatprep.subr.bf16.mxu0 0
        %706 = vmatpush2.bf16.msra.mxu0 %v666
        %707 = vmatprep.subr.bf16.mxu0 0
        %708 = vmatpush2.bf16.msra.mxu0 %v665
        %709 = vmatprep.subr.bf16.mxu0 0
        %710 = vmatpush2.bf16.msra.mxu0 %v664
        %711 = vmatprep.subr.bf16.mxu0 0
        %712 = vmatpush2.bf16.msra.mxu0 %v663
        %713 = vmatprep.subr.bf16.mxu0 0
        %714 = vmatpush2.bf16.msra.mxu0 %v662
        %715 = vmatprep.subr.bf16.mxu0 0
        %716 = vmatpush2.bf16.msra.mxu0 %v661
        %717 = vmatprep.mubr.bf16.mxu0 %v556
        %718 = vmatmul.mubr.bf16.gmra.mxu0 %v555
        %v719 = vpop.f32.mrf.mxu0
        %v720 = vadd.f32 0.0, %v719
        %v721 = vpop.f32.mrf.mxu0
        %v722 = vpop.f32.mrf.mxu0
        %v723 = vadd.f32 0.0, %v722
        %v724 = vpop.f32.mrf.mxu0
        %725 = vdwg.mxu0
        %v726 = vadd.f32 %v553, %v720
        %v727 = vadd.f32 %v554, %v723
        %728 = vst [vmem:[#allocation10] sm:$0xff] %v726
        %729 = vst [vmem:[#allocation10 + $0x8] sm:$0xff] %v727
        %p730 = scmp.eq.s32.totalorder %s29, 1
        // Predicated region
        $region61: #{tpu_custom_call.1} parent=39 // pred_check
          %p731 = pneg %p730
        $region62: #{tpu_custom_call.1} parent=39 // pred_check_branch
          %733 = sbr.rel (%p731) target = $region64
        $region63: #{tpu_custom_call.1} parent=39 // pred_region
          %v734 = vld [vmem:[#allocation10] sm:$0xff]
          %v735 = vld [vmem:[#allocation10 + $0x8] sm:$0xff]
          %v736 = vld [vmem:[%s4] sm:$0x1]
          %v738 = vlaneseq
          %v739 = vshrl.u32 %v738, 7
          %v740 = vsub.s32 0, %v739
          %v741 = vrot.slane %v736, %v740
          %v743 = vadd.f32 %v734, %v741
          %v744 = vadd.f32 %v735, %v741
          %745 = vst [vmem:[#allocation10] sm:$0xff] %v743
          %746 = vst [vmem:[#allocation10 + $0x8] sm:$0xff] %v744
        $region64: #{tpu_custom_call.1} parent=39 // pred_fallthru
          _
        // Predicated region
        $region65: #{tpu_custom_call.1} parent=39 // pred_check
          %p747 = pneg %p179
        $region66: #{tpu_custom_call.1} parent=39 // pred_check_branch
          %749 = sbr.rel (%p747) target = $region68
        $region67: #{tpu_custom_call.1} parent=39 // pred_region
          %s750 = smul.u32 2, %s28
          %s752 = ssub.s32 256, 256
          %753 = vsyncadd [#allocation4], %s752
          %s754 = smul.addr %s750, 128
          %s755 = scalar_lea.hbm %s5, %s754
          %s756 = sshll.u32 [#allocation10], 4
          %s757 = int_to_ptr.vmem [resolvable:$true] %s756
          %762 = dma.vmem_to_hbm [thread:$0]  %s757, 256, %s755, [#allocation4], 128, 128, 8
        $region68: #{tpu_custom_call.1} parent=39 // pred_fallthru
          _
        // Predicated region
        $region69: #{tpu_custom_call.1} parent=39 // pred_check
          %p763 = pneg %p179
        $region70: #{tpu_custom_call.1} parent=39 // pred_check_branch
          %765 = sbr.rel (%p763) target = $region72
        $region71: #{tpu_custom_call.1} parent=39 // pred_region
          %766 = dma.done [#allocation4], 256
        $region72: #{tpu_custom_call.1} parent=39 // pred_fallthru
          _
      $region40: #{tpu_custom_call.1} parent=5 // pred_fallthru
        _
      %p767 = scmp.le.s32.totalorder 2, %s19
      // Predicated region
      $region73: #{tpu_custom_call.1} parent=5 // pred_check
        %p768 = pneg %p767
      $region74: #{tpu_custom_call.1} parent=5 // pred_check_branch
        %770 = sbr.rel (%p768) target = $region76
      $region75: #{tpu_custom_call.1} parent=5 // pred_region
        %s771 = ssub.s32 %s19, 2
      $region76: #{tpu_custom_call.1} parent=5 // pred_fallthru
        _
    $region6: #{tpu_custom_call.1} parent=1 // loop_footer
      %s23 = sadd.s32 1, %s19
    $region7: #{tpu_custom_call.1} parent=1 // loop_footer_branch
      %18 = sbr.rel target = $region3
    $region8: #{tpu_custom_call.1} parent=1 // loop_exit
      _
    %772 = vsyncpa [#allocation3], 1
    %s773 = scalar_lea.sflag [#allocation3], 1
    %774 = vsyncpa %s773, 1
    %775 = vsyncpa [#allocation6], 1
    %s776 = scalar_lea.sflag [#allocation6], 1
    %777 = vsyncpa %s776, 1
    %778 = vsyncpa [#allocation9], 1
    %s779 = scalar_lea.sflag [#allocation9], 1
    %780 = vsyncpa %s779, 1
    %781 = vsyncpa [#allocation4], 1
    %s782 = scalar_lea.sflag [#allocation4], 1
    %783 = vsyncpa %s782, 1

</llo_original>
